<compile_context>
chip_gen: v6e
topology: v6e:2x2x1
jax: 0.10.0
libtpu: 0.0.40
codegen_flags: <defaults>
</compile_context>

<pallas_src>
import jax
import jax.numpy as jnp
from jax.experimental import pallas as pl
from jax.experimental.pallas import tpu as pltpu


def _round_up(n, m):
    return ((n + m - 1) // m) * m


def _critic_kernel(x_ref, w1_ref, b1_ref, w2_ref, b2_ref, w3_ref, b3_ref, o_ref):
    # x arrives in its HBM dtype; cast per tile (free VPU filler, no extra
    # HBM pass in the wrapper).
    x = x_ref[...].astype(w1_ref.dtype)

    # Layer 1: Linear + ReLU (MXU, f32 accumulation; bias/ReLU in f32).
    h1 = jnp.dot(x, w1_ref[...], preferred_element_type=jnp.float32)
    h1 = jnp.maximum(h1 + b1_ref[...], 0.0)

    # Layer 2: Linear + ReLU.
    h2 = jnp.dot(h1.astype(w2_ref.dtype), w2_ref[...],
                 preferred_element_type=jnp.float32)
    h2 = jnp.maximum(h2 + b2_ref[...], 0.0)

    # Layer 3: folded value head (fold*h2 -> fold) via the block-diagonal w3.
    v = jnp.dot(h2.astype(w3_ref.dtype), w3_ref[...],
                preferred_element_type=jnp.float32)
    o_ref[...] = (v + b3_ref[0, 0]).astype(o_ref.dtype)   # b3: SMEM scalar


def basic_critic_forward(x, params, *, tile_b=8192, compute_dtype=jnp.float32,
                         vmem_limit_bytes=None):
    """x: [B, obs_dim] (any float dtype; cast to `compute_dtype` per tile
    in-kernel for the MXU).  params: pre-transposed weights [in, out] and
    biases [1, out].  Returns [B, 1] float32."""
    B, obs_dim = x.shape
    h1_dim = params["w1"].shape[1]
    h2_dim = params["w2"].shape[1]

    # Lane-pack `fold` batch rows per packed row when the layer widths are
    # small enough that the folded (block-diagonal) weights stay tiny.
    fold = 8 if 8 * max(obs_dim, h1_dim, h2_dim) <= 1024 else 1

    # Tiny pad (< fold rows) only when needed for the packing reshape.
    Bpf = _round_up(B, fold)
    if Bpf != B:
        x = jnp.pad(x, ((0, Bpf - B), (0, 0)))
    packed_rows = Bpf // fold
    pack_w = fold * obs_dim
    x_p = x.reshape(packed_rows, pack_w)       # free row-major reshape, dtype kept

    # Folded weights/biases (tiny; built once per call).
    eye = jnp.eye(fold, dtype=jnp.float32)
    w1 = jnp.kron(eye, params["w1"].astype(jnp.float32)).astype(compute_dtype)
    w2 = jnp.kron(eye, params["w2"].astype(jnp.float32)).astype(compute_dtype)
    w3 = jnp.kron(eye, params["w3"].reshape(h2_dim, 1).astype(jnp.float32)
                  ).astype(compute_dtype)
    b1 = jnp.tile(params["b1"].reshape(1, h1_dim), (1, fold)).astype(jnp.float32)
    b2 = jnp.tile(params["b2"].reshape(1, h2_dim), (1, fold)).astype(jnp.float32)
    b3 = params["b3"].reshape(1, 1).astype(jnp.float32)

    # Batch tile (in original batch rows): multiple of 8*fold (sublane rows),
    # clamped to the batch, capped so the grid keeps >= 2 steps (v7x megacore).
    unit = 8 * fold
    tile_b = _round_up(max(int(tile_b), unit), unit)
    tile_b = min(tile_b, _round_up(Bpf, unit))
    tile_b = min(tile_b, _round_up(max((Bpf + 1) // 2, unit), unit))
    tile_rows = tile_b // fold

    num_tiles = pl.cdiv(packed_rows, tile_rows)     # partial tail tile allowed
    out_rows = num_tiles * tile_rows                 # all output writes in-bounds

    def resident(shape):
        # Full-size block, constant index map -> stays in VMEM across steps.
        return pl.BlockSpec(shape, lambda i: (0, 0))

    out = pl.pallas_call(
        _critic_kernel,
        out_shape=jax.ShapeDtypeStruct((out_rows, fold), jnp.float32),
        grid=(num_tiles,),
        in_specs=[
            pl.BlockSpec((tile_rows, pack_w), lambda i: (i, 0)),   # x: tiled batch
            resident((pack_w, fold * h1_dim)),                     # W1 (folded)
            resident((1, fold * h1_dim)),                          # b1 (tiled)
            resident((fold * h1_dim, fold * h2_dim)),              # W2 (folded)
            resident((1, fold * h2_dim)),                          # b2 (tiled)
            resident((fold * h2_dim, fold)),                       # w3 (folded)
            pl.BlockSpec(memory_space=pltpu.MemorySpace.SMEM),     # b3 scalar
        ],
        out_specs=pl.BlockSpec((tile_rows, fold), lambda i: (i, 0)),
        compiler_params=pltpu.CompilerParams(
            dimension_semantics=("parallel",),
            vmem_limit_bytes=vmem_limit_bytes),
    )(x_p, w1, b1, w2, b2, w3, b3)

    # out[r, f] is the value of batch row r*fold + f -> row-major unpack.
    return out.reshape(-1, 1)[:B]


def init_params(key, observation_space, hiddens=(64, 32)):
    """Deterministic synthetic init (PyTorch nn.Linear-style uniform bounds)."""
    dims = [observation_space, hiddens[0], hiddens[1], 1]
    params = {}
    for i in range(3):
        fan_in, fan_out = dims[i], dims[i + 1]
        key, kw, kb = jax.random.split(key, 3)
        bound = 1.0 / jnp.sqrt(fan_in)
        # stored as [in, out] (transpose of PyTorch's [out, in])
        params[f"w{i+1}"] = jax.random.uniform(
            kw, (fan_in, fan_out), jnp.float32, -bound, bound)
        params[f"b{i+1}"] = jax.random.uniform(
            kb, (1, fan_out), jnp.float32, -bound, bound)
    return params


def _reference(x, params):
    hp = jax.lax.Precision.HIGHEST
    h1 = jnp.maximum(jnp.dot(x, params["w1"], precision=hp) + params["b1"], 0.0)
    h2 = jnp.maximum(jnp.dot(h1, params["w2"], precision=hp) + params["b2"], 0.0)
    return jnp.dot(h2, params["w3"], precision=hp) + params["b3"]


if __name__ == "__main__":
    key = jax.random.PRNGKey(0)

    # --- Typical BasicCritic regime: small obs -> lane-packed (fold=8) path ---
    observation_space = 16
    batch = 20                       # not a multiple of 8: exercises tiny pad
    key, kx = jax.random.split(key)
    x = jax.random.normal(kx, (batch, observation_space), dtype=jnp.float32)
    params = init_params(key, observation_space)
    v_ref = _reference(x, params)

    v = basic_critic_forward(x, params)
    jax.block_until_ready(v)
    assert v.shape == (batch, 1)
    assert jnp.allclose(v, v_ref, atol=1e-3, rtol=1e-3), "f32 packed mismatch"

    v_bf16 = basic_critic_forward(x, params, compute_dtype=jnp.bfloat16)
    jax.block_until_ready(v_bf16)
    assert jnp.allclose(v_bf16, v_ref, atol=5e-2, rtol=5e-2), "bf16 mismatch"

    # --- Multi-tile grid with a partial tail tile (no pad-to-tile-multiple) ---
    batch2 = 200
    key, kx2 = jax.random.split(key)
    x2 = jax.random.normal(kx2, (batch2, observation_space), dtype=jnp.float32)
    v2 = basic_critic_forward(x2, params, tile_b=128)
    jax.block_until_ready(v2)
    assert v2.shape == (batch2, 1)
    assert jnp.allclose(v2, _reference(x2, params), atol=1e-3, rtol=1e-3), \
        "multi-tile mismatch"

    # --- Large-obs fallback (fold=1) path ---
    obs_big = 256
    key, kx3 = jax.random.split(key)
    x3 = jax.random.normal(kx3, (24, obs_big), dtype=jnp.float32)
    params_big = init_params(key, obs_big)
    v3 = basic_critic_forward(x3, params_big, tile_b=128)
    jax.block_until_ready(v3)
    assert v3.shape == (24, 1)
    assert jnp.allclose(v3, _reference(x3, params_big), atol=1e-3, rtol=1e-3), \
        "fold=1 mismatch"

    print("KERNEL_OK")
</pallas_src>

<mosaic_0001>
module attributes {stable_mosaic.version = 11 : i64} {
  func.func @_critic_kernel(%arg0: i32, %arg1: memref<8x128xf32, #tpu.memory_space<vmem>>, %arg2: memref<128x512xf32, #tpu.memory_space<vmem>>, %arg3: memref<1x512xf32, #tpu.memory_space<vmem>>, %arg4: memref<512x256xf32, #tpu.memory_space<vmem>>, %arg5: memref<1x256xf32, #tpu.memory_space<vmem>>, %arg6: memref<256x8xf32, #tpu.memory_space<vmem>>, %arg7: memref<1x1xf32, #tpu.memory_space<smem>>, %arg8: memref<8x8xf32, #tpu.memory_space<vmem>>) attributes {dimension_semantics = [#tpu.dimension_semantics<parallel>], iteration_bounds = array<i64: 1>, scalar_prefetch = 0 : i64, scratch_operands = 0 : i64, tpu.core_type = #tpu.core_type<tc>, window_params = [{transform_indices = @transform_0, window_bounds = array<i64: 8, 128>}, {pipeline_mode = #tpu.pipeline_mode<synchronous>, transform_indices = @transform_1, window_bounds = array<i64: 128, 512>}, {pipeline_mode = #tpu.pipeline_mode<synchronous>, transform_indices = @transform_2, window_bounds = array<i64: 1, 512>}, {pipeline_mode = #tpu.pipeline_mode<synchronous>, transform_indices = @transform_3, window_bounds = array<i64: 512, 256>}, {pipeline_mode = #tpu.pipeline_mode<synchronous>, transform_indices = @transform_4, window_bounds = array<i64: 1, 256>}, {pipeline_mode = #tpu.pipeline_mode<synchronous>, transform_indices = @transform_5, window_bounds = array<i64: 256, 8>}, {transform_indices = @transform_6, window_bounds = array<i64: 1, 1>}, {transform_indices = @transform_7, window_bounds = array<i64: 8, 8>}]} {
    %c0 = arith.constant 0 : index
    %c0_0 = arith.constant 0 : index
    %0 = vector.load %arg1[%c0, %c0_0] : memref<8x128xf32, #tpu.memory_space<vmem>>, vector<8x128xf32>
    %c0_1 = arith.constant 0 : index
    %c0_2 = arith.constant 0 : index
    %1 = vector.load %arg2[%c0_1, %c0_2] : memref<128x512xf32, #tpu.memory_space<vmem>>, vector<128x512xf32>
    %cst = arith.constant dense<0.000000e+00> : vector<8x512xf32>
    %2 = tpu.matmul %0, %1, %cst {dimension_numbers = #tpu.dot_dimension_numbers<[1], [0], [0], [1], [0, 0, 1, 1], [], []>} : vector<8x128xf32>, vector<128x512xf32>, vector<8x512xf32> -> vector<8x512xf32>
    %c0_3 = arith.constant 0 : index
    %c0_4 = arith.constant 0 : index
    %3 = vector.load %arg3[%c0_3, %c0_4] : memref<1x512xf32, #tpu.memory_space<vmem>>, vector<1x512xf32>
    %4 = vector.broadcast %3 : vector<1x512xf32> to vector<8x512xf32>
    %5 = arith.addf %2, %4 : vector<8x512xf32>
    %cst_5 = arith.constant 0.000000e+00 : f32
    %6 = vector.broadcast %cst_5 : f32 to vector<8x512xf32>
    %7 = arith.maximumf %5, %6 : vector<8x512xf32>
    %c0_6 = arith.constant 0 : index
    %c0_7 = arith.constant 0 : index
    %8 = vector.load %arg4[%c0_6, %c0_7] : memref<512x256xf32, #tpu.memory_space<vmem>>, vector<512x256xf32>
    %cst_8 = arith.constant dense<0.000000e+00> : vector<8x256xf32>
    %9 = tpu.matmul %7, %8, %cst_8 {dimension_numbers = #tpu.dot_dimension_numbers<[1], [0], [0], [1], [0, 0, 1, 1], [], []>} : vector<8x512xf32>, vector<512x256xf32>, vector<8x256xf32> -> vector<8x256xf32>
    %c0_9 = arith.constant 0 : index
    %c0_10 = arith.constant 0 : index
    %10 = vector.load %arg5[%c0_9, %c0_10] : memref<1x256xf32, #tpu.memory_space<vmem>>, vector<1x256xf32>
    %11 = vector.broadcast %10 : vector<1x256xf32> to vector<8x256xf32>
    %12 = arith.addf %9, %11 : vector<8x256xf32>
    %cst_11 = arith.constant 0.000000e+00 : f32
    %13 = vector.broadcast %cst_11 : f32 to vector<8x256xf32>
    %14 = arith.maximumf %12, %13 : vector<8x256xf32>
    %c0_12 = arith.constant 0 : index
    %c0_13 = arith.constant 0 : index
    %15 = vector.load %arg6[%c0_12, %c0_13] : memref<256x8xf32, #tpu.memory_space<vmem>>, vector<256x8xf32>
    %cst_14 = arith.constant dense<0.000000e+00> : vector<8x8xf32>
    %16 = tpu.matmul %14, %15, %cst_14 {dimension_numbers = #tpu.dot_dimension_numbers<[1], [0], [0], [1], [0, 0, 1, 1], [], []>} : vector<8x256xf32>, vector<256x8xf32>, vector<8x8xf32> -> vector<8x8xf32>
    %c0_15 = arith.constant 0 : index
    %c0_16 = arith.constant 0 : index
    %17 = memref.load %arg7[%c0_15, %c0_16] : memref<1x1xf32, #tpu.memory_space<smem>>
    %18 = vector.broadcast %17 : f32 to vector<8x8xf32>
    %19 = arith.addf %16, %18 : vector<8x8xf32>
    %c0_17 = arith.constant 0 : index
    %c0_18 = arith.constant 0 : index
    %20 = vector.load %arg8[%c0_17, %c0_18] : memref<8x8xf32, #tpu.memory_space<vmem>>, vector<8x8xf32>
    tpu.vector_store %arg8[%c0_17, %c0_18], %19 {strides = array<i32>} : memref<8x8xf32, #tpu.memory_space<vmem>>, vector<8x8xf32>,
    return
  }
  func.func @transform_0(%arg0: i32) -> (i32, i32) {
    %c0_i32 = arith.constant 0 : i32
    %c0_i32_0 = arith.constant 0 : i32
    return %arg0, %c0_i32 : i32, i32
  }
  func.func @transform_1(%arg0: i32) -> (i32, i32) {
    %c0_i32 = arith.constant 0 : i32
    %c0_i32_0 = arith.constant 0 : i32
    %c0_i32_1 = arith.constant 0 : i32
    return %c0_i32, %c0_i32_0 : i32, i32
  }
  func.func @transform_2(%arg0: i32) -> (i32, i32) {
    %c0_i32 = arith.constant 0 : i32
    %c0_i32_0 = arith.constant 0 : i32
    %c0_i32_1 = arith.constant 0 : i32
    return %c0_i32, %c0_i32_0 : i32, i32
  }
  func.func @transform_3(%arg0: i32) -> (i32, i32) {
    %c0_i32 = arith.constant 0 : i32
    %c0_i32_0 = arith.constant 0 : i32
    %c0_i32_1 = arith.constant 0 : i32
    return %c0_i32, %c0_i32_0 : i32, i32
  }
  func.func @transform_4(%arg0: i32) -> (i32, i32) {
    %c0_i32 = arith.constant 0 : i32
    %c0_i32_0 = arith.constant 0 : i32
    %c0_i32_1 = arith.constant 0 : i32
    return %c0_i32, %c0_i32_0 : i32, i32
  }
  func.func @transform_5(%arg0: i32) -> (i32, i32) {
    %c0_i32 = arith.constant 0 : i32
    %c0_i32_0 = arith.constant 0 : i32
    %c0_i32_1 = arith.constant 0 : i32
    return %c0_i32, %c0_i32_0 : i32, i32
  }
  func.func @transform_6(%arg0: i32) -> (i32, i32) {
    %c0_i32 = arith.constant 0 : i32
    %c0_i32_0 = arith.constant 0 : i32
    %c0_i32_1 = arith.constant 0 : i32
    return %c0_i32, %c0_i32_0 : i32, i32
  }
  func.func @transform_7(%arg0: i32) -> (i32, i32) {
    %c0_i32 = arith.constant 0 : i32
    %c0_i32_0 = arith.constant 0 : i32
    return %arg0, %c0_i32 : i32, i32
  }
}

</mosaic_0001>

<llo_original>
// kernel: tpu_custom_call.1
$region0: #{tpu_custom_call.1}
  #allocation0 [shape = 'u32[]', space=smem, size = 0x4, offset = 0x4, fixed_abs, tag = 'smem constant byte address 0x4 - core index']
  #allocation1 [shape = 'u32[144,128]{1,0:T(1,128)}', space=vmem, size = 0x12000, scoped, tag = 'internal scratch']
  #allocation2 [shape = 'f32[1,1]{1,0:T(1,128)S(6)}', space=smem, size = 0x200, scoped, tag = 'scoped memory for tpu_custom_call.1']
  %s0 = inlined_call_operand.vmem [shape: f32[3,128], index: 0, kind: input, shape index: {}]
  %s1 = inlined_call_operand.hbm [shape: f32[128,512], index: 1, kind: input, shape index: {}]
  %s2 = inlined_call_operand.vmem [shape: f32[1,512], index: 2, kind: input, shape index: {}]
  %s3 = inlined_call_operand.hbm [shape: f32[512,256], index: 3, kind: input, shape index: {}]
  %s4 = inlined_call_operand.vmem [shape: f32[1,256], index: 4, kind: input, shape index: {}]
  %s5 = inlined_call_operand.vmem [shape: f32[256,8], index: 5, kind: input, shape index: {}]
  %s6 = inlined_call_operand.<no memory space> [shape: f32[1,1], index: 6, kind: input, shape index: {}]
  %s7 = inlined_call_operand.hbm [shape: f32[8,8], index: 7, kind: output, shape index: {}]
  %s8 = sld [smem:[#allocation0]]
  $region46: #{tpu_custom_call.1} parent=0
    _
  %s10 = ssub.s32 1, %s8
  %s11 = scalar_select 0, %s10, %s8
  %12 = sst [smem:[#allocation2]] %s6
  $region1: #{tpu_custom_call.1} parent=0
    #allocation3 [shape = 'u8[262144]{0}', space=vmem, size = 0x40000, scoped, tag = 'input window, operand 1, single buffered']
    #allocation4 [shape = 's32[1]{0}', space=sflag, size = 0x4, scoped, tag = 'scoped memory for tpu_custom_call.1']
    #allocation5 [shape = 's32[1]{0}', space=sflag, size = 0x4, scoped, tag = 'scoped memory for tpu_custom_call.1']
    #allocation6 [shape = 'u8[524288]{0}', space=vmem, size = 0x80000, scoped, tag = 'input window, operand 3, single buffered']
    #allocation7 [shape = 's32[1]{0}', space=sflag, size = 0x4, scoped, tag = 'scoped memory for tpu_custom_call.1']
    #allocation8 [shape = 'u8[4096]{0}', space=vmem, size = 0x1000, scoped, tag = 'output window, operand 0, single buffered']
    %13 = vsyncpa [#allocation4], 0
    %14 = vsyncpa [#allocation7], 0
    %15 = vsyncpa [#allocation5], 0
    // Predicated region
    $region2: #{tpu_custom_call.1} parent=1 // pred_check
      _
    $region3: #{tpu_custom_call.1} parent=1 // pred_check_branch
      %17 = sbr.rel (0) target = $region5
    $region4: #{tpu_custom_call.1} parent=1 // pred_region
      _
    $region5: #{tpu_custom_call.1} parent=1 // pred_fallthru
      _
    // Predicated region
    $region6: #{tpu_custom_call.1} parent=1 // pred_check
      _
    $region7: #{tpu_custom_call.1} parent=1 // pred_check_branch
      %19 = sbr.rel (0) target = $region9
    $region8: #{tpu_custom_call.1} parent=1 // pred_region
      %s21 = ssub.s32 8192, 8192
      %22 = vsyncadd [#allocation4], %s21
      %s23 = sshll.u32 [#allocation3], 4
      %s24 = int_to_ptr.vmem [resolvable:$true] %s23
      %29 = dma.hbm_to_vmem [thread:$0]  %s1, 8192, %s24, [#allocation4], 512, 512, 32
    $region9: #{tpu_custom_call.1} parent=1 // pred_fallthru
      _
    // Predicated region
    $region10: #{tpu_custom_call.1} parent=1 // pred_check
      _
    $region11: #{tpu_custom_call.1} parent=1 // pred_check_branch
      %31 = sbr.rel (0) target = $region13
    $region12: #{tpu_custom_call.1} parent=1 // pred_region
      _
    $region13: #{tpu_custom_call.1} parent=1 // pred_fallthru
      _
    // Predicated region
    $region14: #{tpu_custom_call.1} parent=1 // pred_check
      _
    $region15: #{tpu_custom_call.1} parent=1 // pred_check_branch
      %33 = sbr.rel (0) target = $region17
    $region16: #{tpu_custom_call.1} parent=1 // pred_region
      %s35 = ssub.s32 16384, 16384
      %36 = vsyncadd [#allocation7], %s35
      %s37 = sshll.u32 [#allocation6], 4
      %s38 = int_to_ptr.vmem [resolvable:$true] %s37
      %43 = dma.hbm_to_vmem [thread:$0]  %s3, 16384, %s38, [#allocation7], 256, 256, 16
    $region17: #{tpu_custom_call.1} parent=1 // pred_fallthru
      _
    // Predicated region
    $region18: #{tpu_custom_call.1} parent=1 // pred_check
      _
    $region19: #{tpu_custom_call.1} parent=1 // pred_check_branch
      %45 = sbr.rel (0) target = $region21
    $region20: #{tpu_custom_call.1} parent=1 // pred_region
      _
    $region21: #{tpu_custom_call.1} parent=1 // pred_fallthru
      _
    // Predicated region
    $region22: #{tpu_custom_call.1} parent=1 // pred_check
      _
    $region23: #{tpu_custom_call.1} parent=1 // pred_check_branch
      %47 = sbr.rel (0) target = $region25
    $region24: #{tpu_custom_call.1} parent=1 // pred_region
      _
    $region25: #{tpu_custom_call.1} parent=1 // pred_fallthru
      _
    // Predicated region
    $region26: #{tpu_custom_call.1} parent=1 // pred_check
      _
    $region27: #{tpu_custom_call.1} parent=1 // pred_check_branch
      %49 = sbr.rel (0) target = $region29
    $region28: #{tpu_custom_call.1} parent=1 // pred_region
      _
    $region29: #{tpu_custom_call.1} parent=1 // pred_fallthru
      _
    // Predicated region
    $region30: #{tpu_custom_call.1} parent=1 // pred_check
      _
    $region31: #{tpu_custom_call.1} parent=1 // pred_check_branch
      %51 = sbr.rel (0) target = $region33
    $region32: #{tpu_custom_call.1} parent=1 // pred_region
      %52 = dma.done [#allocation4], 8192
    $region33: #{tpu_custom_call.1} parent=1 // pred_fallthru
      _
    // Predicated region
    $region34: #{tpu_custom_call.1} parent=1 // pred_check
      _
    $region35: #{tpu_custom_call.1} parent=1 // pred_check_branch
      %54 = sbr.rel (0) target = $region37
    $region36: #{tpu_custom_call.1} parent=1 // pred_region
      %55 = dma.done [#allocation7], 16384
    $region37: #{tpu_custom_call.1} parent=1 // pred_fallthru
      _
    %v56 = vld [vmem:[%s0] sm:$0xff]
    %v57 = vld [vmem:[#allocation3] sm:$0xff]
    %v58 = vld [vmem:[#allocation3 + $0x8] sm:$0xff]
    %v59 = vld [vmem:[#allocation3 + $0x10] sm:$0xff]
    %v60 = vld [vmem:[#allocation3 + $0x18] sm:$0xff]
    %v61 = vld [vmem:[#allocation3 + $0x20] sm:$0xff]
    %v62 = vld [vmem:[#allocation3 + $0x28] sm:$0xff]
    %v63 = vld [vmem:[#allocation3 + $0x30] sm:$0xff]
    %v64 = vld [vmem:[#allocation3 + $0x38] sm:$0xff]
    %v65 = vld [vmem:[#allocation3 + $0x40] sm:$0xff]
    %v66 = vld [vmem:[#allocation3 + $0x48] sm:$0xff]
    %v67 = vld [vmem:[#allocation3 + $0x50] sm:$0xff]
    %v68 = vld [vmem:[#allocation3 + $0x58] sm:$0xff]
    %v69 = vld [vmem:[#allocation3 + $0x60] sm:$0xff]
    %v70 = vld [vmem:[#allocation3 + $0x68] sm:$0xff]
    %v71 = vld [vmem:[#allocation3 + $0x70] sm:$0xff]
    %v72 = vld [vmem:[#allocation3 + $0x78] sm:$0xff]
    %v73 = vld [vmem:[#allocation3 + $0x80] sm:$0xff]
    %v74 = vld [vmem:[#allocation3 + $0x88] sm:$0xff]
    %v75 = vld [vmem:[#allocation3 + $0x90] sm:$0xff]
    %v76 = vld [vmem:[#allocation3 + $0x98] sm:$0xff]
    %v77 = vld [vmem:[#allocation3 + $0xa0] sm:$0xff]
    %v78 = vld [vmem:[#allocation3 + $0xa8] sm:$0xff]
    %v79 = vld [vmem:[#allocation3 + $0xb0] sm:$0xff]
    %v80 = vld [vmem:[#allocation3 + $0xb8] sm:$0xff]
    %v81 = vld [vmem:[#allocation3 + $0xc0] sm:$0xff]
    %v82 = vld [vmem:[#allocation3 + $0xc8] sm:$0xff]
    %v83 = vld [vmem:[#allocation3 + $0xd0] sm:$0xff]
    %v84 = vld [vmem:[#allocation3 + $0xd8] sm:$0xff]
    %v85 = vld [vmem:[#allocation3 + $0xe0] sm:$0xff]
    %v86 = vld [vmem:[#allocation3 + $0xe8] sm:$0xff]
    %v87 = vld [vmem:[#allocation3 + $0xf0] sm:$0xff]
    %v88 = vld [vmem:[#allocation3 + $0xf8] sm:$0xff]
    %v89 = vld [vmem:[#allocation3 + $0x100] sm:$0xff]
    %v90 = vld [vmem:[#allocation3 + $0x108] sm:$0xff]
    %v91 = vld [vmem:[#allocation3 + $0x110] sm:$0xff]
    %v92 = vld [vmem:[#allocation3 + $0x118] sm:$0xff]
    %v93 = vld [vmem:[#allocation3 + $0x120] sm:$0xff]
    %v94 = vld [vmem:[#allocation3 + $0x128] sm:$0xff]
    %v95 = vld [vmem:[#allocation3 + $0x130] sm:$0xff]
    %v96 = vld [vmem:[#allocation3 + $0x138] sm:$0xff]
    %v97 = vld [vmem:[#allocation3 + $0x140] sm:$0xff]
    %v98 = vld [vmem:[#allocation3 + $0x148] sm:$0xff]
    %v99 = vld [vmem:[#allocation3 + $0x150] sm:$0xff]
    %v100 = vld [vmem:[#allocation3 + $0x158] sm:$0xff]
    %v101 = vld [vmem:[#allocation3 + $0x160] sm:$0xff]
    %v102 = vld [vmem:[#allocation3 + $0x168] sm:$0xff]
    %v103 = vld [vmem:[#allocation3 + $0x170] sm:$0xff]
    %v104 = vld [vmem:[#allocation3 + $0x178] sm:$0xff]
    %v105 = vld [vmem:[#allocation3 + $0x180] sm:$0xff]
    %v106 = vld [vmem:[#allocation3 + $0x188] sm:$0xff]
    %v107 = vld [vmem:[#allocation3 + $0x190] sm:$0xff]
    %v108 = vld [vmem:[#allocation3 + $0x198] sm:$0xff]
    %v109 = vld [vmem:[#allocation3 + $0x1a0] sm:$0xff]
    %v110 = vld [vmem:[#allocation3 + $0x1a8] sm:$0xff]
    %v111 = vld [vmem:[#allocation3 + $0x1b0] sm:$0xff]
    %v112 = vld [vmem:[#allocation3 + $0x1b8] sm:$0xff]
    %v113 = vld [vmem:[#allocation3 + $0x1c0] sm:$0xff]
    %v114 = vld [vmem:[#allocation3 + $0x1c8] sm:$0xff]
    %v115 = vld [vmem:[#allocation3 + $0x1d0] sm:$0xff]
    %v116 = vld [vmem:[#allocation3 + $0x1d8] sm:$0xff]
    %v117 = vld [vmem:[#allocation3 + $0x1e0] sm:$0xff]
    %v118 = vld [vmem:[#allocation3 + $0x1e8] sm:$0xff]
    %v119 = vld [vmem:[#allocation3 + $0x1f0] sm:$0xff]
    %v120 = vld [vmem:[#allocation3 + $0x1f8] sm:$0xff]
    %v121 = vld [vmem:[%s2] sm:$0xf]
    %v123 = vlaneseq
    %v124 = vshrl.u32 %v123, 7
    %v125 = vsub.s32 0, %v124
    %v126 = vrot.slane %v121, %v125
    %v127 = vlaneseq
    %v128 = vshrl.u32 %v127, 7
    %v129 = vsub.s32 1, %v128
    %v130 = vrot.slane %v121, %v129
    %v131 = vlaneseq
    %v132 = vshrl.u32 %v131, 7
    %v133 = vsub.s32 2, %v132
    %v134 = vrot.slane %v121, %v133
    %v135 = vlaneseq
    %v136 = vshrl.u32 %v135, 7
    %v137 = vsub.s32 3, %v136
    %v138 = vrot.slane %v121, %v137
    %143 = vmatprep.subr.mxu0 %v118
    %144 = vmatpush1.msra.mxu0 %v117
    %145 = vmatprep.subr.mxu0 %v114
    %146 = vmatpush1.msra.mxu0 %v113
    %147 = vmatprep.subr.mxu0 %v110
    %148 = vmatpush1.msra.mxu0 %v109
    %149 = vmatprep.subr.mxu0 %v106
    %150 = vmatpush1.msra.mxu0 %v105
    %151 = vmatprep.subr.mxu0 %v102
    %152 = vmatpush1.msra.mxu0 %v101
    %153 = vmatprep.subr.mxu0 %v98
    %154 = vmatpush1.msra.mxu0 %v97
    %155 = vmatprep.subr.mxu0 %v94
    %156 = vmatpush1.msra.mxu0 %v93
    %157 = vmatprep.subr.mxu0 %v90
    %158 = vmatpush1.msra.mxu0 %v89
    %159 = vmatprep.subr.mxu0 %v86
    %160 = vmatpush1.msra.mxu0 %v85
    %161 = vmatprep.subr.mxu0 %v82
    %162 = vmatpush1.msra.mxu0 %v81
    %163 = vmatprep.subr.mxu0 %v78
    %164 = vmatpush1.msra.mxu0 %v77
    %165 = vmatprep.subr.mxu0 %v74
    %166 = vmatpush1.msra.mxu0 %v73
    %167 = vmatprep.subr.mxu0 %v70
    %168 = vmatpush1.msra.mxu0 %v69
    %169 = vmatprep.subr.mxu0 %v66
    %170 = vmatpush1.msra.mxu0 %v65
    %171 = vmatprep.subr.mxu0 %v62
    %172 = vmatpush1.msra.mxu0 %v61
    %173 = vmatprep.subr.mxu0 %v58
    %174 = vmatpush1.msra.mxu0 %v57
    %175 = vmatprep.subr.mxu0 0.0
    %176 = vmatpush2.msra.mxu0 0.0
    %177 = vmatprep.subr.mxu0 0.0
    %178 = vmatpush2.msra.mxu0 0.0
    %179 = vmatprep.subr.mxu0 0.0
    %180 = vmatpush2.msra.mxu0 0.0
    %181 = vmatprep.subr.mxu0 0.0
    %182 = vmatpush2.msra.mxu0 0.0
    %183 = vmatprep.subr.mxu0 0.0
    %184 = vmatpush2.msra.mxu0 0.0
    %185 = vmatprep.subr.mxu0 0.0
    %186 = vmatpush2.msra.mxu0 0.0
    %187 = vmatprep.subr.mxu0 0.0
    %188 = vmatpush2.msra.mxu0 0.0
    %189 = vmatprep.subr.mxu0 0.0
    %190 = vmatpush2.msra.mxu0 0.0
    %191 = vmatprep.subr.mxu0 0.0
    %192 = vmatpush2.msra.mxu0 0.0
    %193 = vmatprep.subr.mxu0 0.0
    %194 = vmatpush2.msra.mxu0 0.0
    %195 = vmatprep.subr.mxu0 0.0
    %196 = vmatpush2.msra.mxu0 0.0
    %197 = vmatprep.subr.mxu0 0.0
    %198 = vmatpush2.msra.mxu0 0.0
    %199 = vmatprep.subr.mxu0 0.0
    %200 = vmatpush2.msra.mxu0 0.0
    %201 = vmatprep.subr.mxu0 0.0
    %202 = vmatpush2.msra.mxu0 0.0
    %203 = vmatprep.subr.mxu0 0.0
    %204 = vmatpush2.msra.mxu0 0.0
    %205 = vmatprep.subr.mxu0 0.0
    %206 = vmatpush2.msra.mxu0 0.0
    %207 = vmatprep.mubr.f32.mxu0 0.0
    %208 = vmatmul.mubr.f32.gmra.mxu0 %v56
    %v209 = vpop.f32.mrf.mxu0
    %v210 = vadd.f32 %v126, %v209
    %v211 = vpop.f32.mrf.mxu0
    %v212 = vadd.f32 %v130, %v211
    %213 = vdwg.mxu0
    %214 = vmatprep.subr.mxu0 %v120
    %215 = vmatpush1.msra.mxu0 %v119
    %216 = vmatprep.subr.mxu0 %v116
    %217 = vmatpush1.msra.mxu0 %v115
    %218 = vmatprep.subr.mxu0 %v112
    %219 = vmatpush1.msra.mxu0 %v111
    %220 = vmatprep.subr.mxu0 %v108
    %221 = vmatpush1.msra.mxu0 %v107
    %222 = vmatprep.subr.mxu0 %v104
    %223 = vmatpush1.msra.mxu0 %v103
    %224 = vmatprep.subr.mxu0 %v100
    %225 = vmatpush1.msra.mxu0 %v99
    %226 = vmatprep.subr.mxu0 %v96
    %227 = vmatpush1.msra.mxu0 %v95
    %228 = vmatprep.subr.mxu0 %v92
    %229 = vmatpush1.msra.mxu0 %v91
    %230 = vmatprep.subr.mxu0 %v88
    %231 = vmatpush1.msra.mxu0 %v87
    %232 = vmatprep.subr.mxu0 %v84
    %233 = vmatpush1.msra.mxu0 %v83
    %234 = vmatprep.subr.mxu0 %v80
    %235 = vmatpush1.msra.mxu0 %v79
    %236 = vmatprep.subr.mxu0 %v76
    %237 = vmatpush1.msra.mxu0 %v75
    %238 = vmatprep.subr.mxu0 %v72
    %239 = vmatpush1.msra.mxu0 %v71
    %240 = vmatprep.subr.mxu0 %v68
    %241 = vmatpush1.msra.mxu0 %v67
    %242 = vmatprep.subr.mxu0 %v64
    %243 = vmatpush1.msra.mxu0 %v63
    %244 = vmatprep.subr.mxu0 %v60
    %245 = vmatpush1.msra.mxu0 %v59
    %246 = vmatprep.subr.mxu0 0.0
    %247 = vmatpush2.msra.mxu0 0.0
    %248 = vmatprep.subr.mxu0 0.0
    %249 = vmatpush2.msra.mxu0 0.0
    %250 = vmatprep.subr.mxu0 0.0
    %251 = vmatpush2.msra.mxu0 0.0
    %252 = vmatprep.subr.mxu0 0.0
    %253 = vmatpush2.msra.mxu0 0.0
    %254 = vmatprep.subr.mxu0 0.0
    %255 = vmatpush2.msra.mxu0 0.0
    %256 = vmatprep.subr.mxu0 0.0
    %257 = vmatpush2.msra.mxu0 0.0
    %258 = vmatprep.subr.mxu0 0.0
    %259 = vmatpush2.msra.mxu0 0.0
    %260 = vmatprep.subr.mxu0 0.0
    %261 = vmatpush2.msra.mxu0 0.0
    %262 = vmatprep.subr.mxu0 0.0
    %263 = vmatpush2.msra.mxu0 0.0
    %264 = vmatprep.subr.mxu0 0.0
    %265 = vmatpush2.msra.mxu0 0.0
    %266 = vmatprep.subr.mxu0 0.0
    %267 = vmatpush2.msra.mxu0 0.0
    %268 = vmatprep.subr.mxu0 0.0
    %269 = vmatpush2.msra.mxu0 0.0
    %270 = vmatprep.subr.mxu0 0.0
    %271 = vmatpush2.msra.mxu0 0.0
    %272 = vmatprep.subr.mxu0 0.0
    %273 = vmatpush2.msra.mxu0 0.0
    %274 = vmatprep.subr.mxu0 0.0
    %275 = vmatpush2.msra.mxu0 0.0
    %276 = vmatprep.subr.mxu0 0.0
    %277 = vmatpush2.msra.mxu0 0.0
    %278 = vmatprep.mubr.f32.mxu0 0.0
    %279 = vmatmul.mubr.f32.gmra.mxu0 %v56
    %v280 = vpop.f32.mrf.mxu0
    %v281 = vadd.f32 %v134, %v280
    %v282 = vpop.f32.mrf.mxu0
    %v283 = vadd.f32 %v138, %v282
    %284 = vdwg.mxu0
    %v285 = vmax.f32 %v210, 0.0
    %v286 = vmax.f32 %v212, 0.0
    %v287 = vmax.f32 %v281, 0.0
    %v288 = vmax.f32 %v283, 0.0
    %v289 = vld [vmem:[#allocation6] sm:$0xff]
    %v290 = vld [vmem:[#allocation6 + $0x8] sm:$0xff]
    %v291 = vld [vmem:[#allocation6 + $0x10] sm:$0xff]
    %v292 = vld [vmem:[#allocation6 + $0x18] sm:$0xff]
    %v293 = vld [vmem:[#allocation6 + $0x20] sm:$0xff]
    %v294 = vld [vmem:[#allocation6 + $0x28] sm:$0xff]
    %v295 = vld [vmem:[#allocation6 + $0x30] sm:$0xff]
    %v296 = vld [vmem:[#allocation6 + $0x38] sm:$0xff]
    %v297 = vld [vmem:[#allocation6 + $0x40] sm:$0xff]
    %v298 = vld [vmem:[#allocation6 + $0x48] sm:$0xff]
    %v299 = vld [vmem:[#allocation6 + $0x50] sm:$0xff]
    %v300 = vld [vmem:[#allocation6 + $0x58] sm:$0xff]
    %v301 = vld [vmem:[#allocation6 + $0x60] sm:$0xff]
    %v302 = vld [vmem:[#allocation6 + $0x68] sm:$0xff]
    %v303 = vld [vmem:[#allocation6 + $0x70] sm:$0xff]
    %v304 = vld [vmem:[#allocation6 + $0x78] sm:$0xff]
    %v305 = vld [vmem:[#allocation6 + $0x80] sm:$0xff]
    %v306 = vld [vmem:[#allocation6 + $0x88] sm:$0xff]
    %v307 = vld [vmem:[#allocation6 + $0x90] sm:$0xff]
    %v308 = vld [vmem:[#allocation6 + $0x98] sm:$0xff]
    %v309 = vld [vmem:[#allocation6 + $0xa0] sm:$0xff]
    %v310 = vld [vmem:[#allocation6 + $0xa8] sm:$0xff]
    %v311 = vld [vmem:[#allocation6 + $0xb0] sm:$0xff]
    %v312 = vld [vmem:[#allocation6 + $0xb8] sm:$0xff]
    %v313 = vld [vmem:[#allocation6 + $0xc0] sm:$0xff]
    %v314 = vld [vmem:[#allocation6 + $0xc8] sm:$0xff]
    %v315 = vld [vmem:[#allocation6 + $0xd0] sm:$0xff]
    %v316 = vld [vmem:[#allocation6 + $0xd8] sm:$0xff]
    %v317 = vld [vmem:[#allocation6 + $0xe0] sm:$0xff]
    %v318 = vld [vmem:[#allocation6 + $0xe8] sm:$0xff]
    %v319 = vld [vmem:[#allocation6 + $0xf0] sm:$0xff]
    %v320 = vld [vmem:[#allocation6 + $0xf8] sm:$0xff]
    %v321 = vld [vmem:[#allocation6 + $0x100] sm:$0xff]
    %v322 = vld [vmem:[#allocation6 + $0x108] sm:$0xff]
    %v323 = vld [vmem:[#allocation6 + $0x110] sm:$0xff]
    %v324 = vld [vmem:[#allocation6 + $0x118] sm:$0xff]
    %v325 = vld [vmem:[#allocation6 + $0x120] sm:$0xff]
    %v326 = vld [vmem:[#allocation6 + $0x128] sm:$0xff]
    %v327 = vld [vmem:[#allocation6 + $0x130] sm:$0xff]
    %v328 = vld [vmem:[#allocation6 + $0x138] sm:$0xff]
    %v329 = vld [vmem:[#allocation6 + $0x140] sm:$0xff]
    %v330 = vld [vmem:[#allocation6 + $0x148] sm:$0xff]
    %v331 = vld [vmem:[#allocation6 + $0x150] sm:$0xff]
    %v332 = vld [vmem:[#allocation6 + $0x158] sm:$0xff]
    %v333 = vld [vmem:[#allocation6 + $0x160] sm:$0xff]
    %v334 = vld [vmem:[#allocation6 + $0x168] sm:$0xff]
    %v335 = vld [vmem:[#allocation6 + $0x170] sm:$0xff]
    %v336 = vld [vmem:[#allocation6 + $0x178] sm:$0xff]
    %v337 = vld [vmem:[#allocation6 + $0x180] sm:$0xff]
    %v338 = vld [vmem:[#allocation6 + $0x188] sm:$0xff]
    %v339 = vld [vmem:[#allocation6 + $0x190] sm:$0xff]
    %v340 = vld [vmem:[#allocation6 + $0x198] sm:$0xff]
    %v341 = vld [vmem:[#allocation6 + $0x1a0] sm:$0xff]
    %v342 = vld [vmem:[#allocation6 + $0x1a8] sm:$0xff]
    %v343 = vld [vmem:[#allocation6 + $0x1b0] sm:$0xff]
    %v344 = vld [vmem:[#allocation6 + $0x1b8] sm:$0xff]
    %v345 = vld [vmem:[#allocation6 + $0x1c0] sm:$0xff]
    %v346 = vld [vmem:[#allocation6 + $0x1c8] sm:$0xff]
    %v347 = vld [vmem:[#allocation6 + $0x1d0] sm:$0xff]
    %v348 = vld [vmem:[#allocation6 + $0x1d8] sm:$0xff]
    %v349 = vld [vmem:[#allocation6 + $0x1e0] sm:$0xff]
    %v350 = vld [vmem:[#allocation6 + $0x1e8] sm:$0xff]
    %v351 = vld [vmem:[#allocation6 + $0x1f0] sm:$0xff]
    %v352 = vld [vmem:[#allocation6 + $0x1f8] sm:$0xff]
    %v353 = vld [vmem:[#allocation6 + $0x200] sm:$0xff]
    %v354 = vld [vmem:[#allocation6 + $0x208] sm:$0xff]
    %v355 = vld [vmem:[#allocation6 + $0x210] sm:$0xff]
    %v356 = vld [vmem:[#allocation6 + $0x218] sm:$0xff]
    %v357 = vld [vmem:[#allocation6 + $0x220] sm:$0xff]
    %v358 = vld [vmem:[#allocation6 + $0x228] sm:$0xff]
    %v359 = vld [vmem:[#allocation6 + $0x230] sm:$0xff]
    %v360 = vld [vmem:[#allocation6 + $0x238] sm:$0xff]
    %v361 = vld [vmem:[#allocation6 + $0x240] sm:$0xff]
    %v362 = vld [vmem:[#allocation6 + $0x248] sm:$0xff]
    %v363 = vld [vmem:[#allocation6 + $0x250] sm:$0xff]
    %v364 = vld [vmem:[#allocation6 + $0x258] sm:$0xff]
    %v365 = vld [vmem:[#allocation6 + $0x260] sm:$0xff]
    %v366 = vld [vmem:[#allocation6 + $0x268] sm:$0xff]
    %v367 = vld [vmem:[#allocation6 + $0x270] sm:$0xff]
    %v368 = vld [vmem:[#allocation6 + $0x278] sm:$0xff]
    %v369 = vld [vmem:[#allocation6 + $0x280] sm:$0xff]
    %v370 = vld [vmem:[#allocation6 + $0x288] sm:$0xff]
    %v371 = vld [vmem:[#allocation6 + $0x290] sm:$0xff]
    %v372 = vld [vmem:[#allocation6 + $0x298] sm:$0xff]
    %v373 = vld [vmem:[#allocation6 + $0x2a0] sm:$0xff]
    %v374 = vld [vmem:[#allocation6 + $0x2a8] sm:$0xff]
    %v375 = vld [vmem:[#allocation6 + $0x2b0] sm:$0xff]
    %v376 = vld [vmem:[#allocation6 + $0x2b8] sm:$0xff]
    %v377 = vld [vmem:[#allocation6 + $0x2c0] sm:$0xff]
    %v378 = vld [vmem:[#allocation6 + $0x2c8] sm:$0xff]
    %v379 = vld [vmem:[#allocation6 + $0x2d0] sm:$0xff]
    %v380 = vld [vmem:[#allocation6 + $0x2d8] sm:$0xff]
    %v381 = vld [vmem:[#allocation6 + $0x2e0] sm:$0xff]
    %v382 = vld [vmem:[#allocation6 + $0x2e8] sm:$0xff]
    %v383 = vld [vmem:[#allocation6 + $0x2f0] sm:$0xff]
    %v384 = vld [vmem:[#allocation6 + $0x2f8] sm:$0xff]
    %v385 = vld [vmem:[#allocation6 + $0x300] sm:$0xff]
    %v386 = vld [vmem:[#allocation6 + $0x308] sm:$0xff]
    %v387 = vld [vmem:[#allocation6 + $0x310] sm:$0xff]
    %v388 = vld [vmem:[#allocation6 + $0x318] sm:$0xff]
    %v389 = vld [vmem:[#allocation6 + $0x320] sm:$0xff]
    %v390 = vld [vmem:[#allocation6 + $0x328] sm:$0xff]
    %v391 = vld [vmem:[#allocation6 + $0x330] sm:$0xff]
    %v392 = vld [vmem:[#allocation6 + $0x338] sm:$0xff]
    %v393 = vld [vmem:[#allocation6 + $0x340] sm:$0xff]
    %v394 = vld [vmem:[#allocation6 + $0x348] sm:$0xff]
    %v395 = vld [vmem:[#allocation6 + $0x350] sm:$0xff]
    %v396 = vld [vmem:[#allocation6 + $0x358] sm:$0xff]
    %v397 = vld [vmem:[#allocation6 + $0x360] sm:$0xff]
    %v398 = vld [vmem:[#allocation6 + $0x368] sm:$0xff]
    %v399 = vld [vmem:[#allocation6 + $0x370] sm:$0xff]
    %v400 = vld [vmem:[#allocation6 + $0x378] sm:$0xff]
    %v401 = vld [vmem:[#allocation6 + $0x380] sm:$0xff]
    %v402 = vld [vmem:[#allocation6 + $0x388] sm:$0xff]
    %v403 = vld [vmem:[#allocation6 + $0x390] sm:$0xff]
    %v404 = vld [vmem:[#allocation6 + $0x398] sm:$0xff]
    %v405 = vld [vmem:[#allocation6 + $0x3a0] sm:$0xff]
    %v406 = vld [vmem:[#allocation6 + $0x3a8] sm:$0xff]
    %v407 = vld [vmem:[#allocation6 + $0x3b0] sm:$0xff]
    %v408 = vld [vmem:[#allocation6 + $0x3b8] sm:$0xff]
    %v409 = vld [vmem:[#allocation6 + $0x3c0] sm:$0xff]
    %v410 = vld [vmem:[#allocation6 + $0x3c8] sm:$0xff]
    %v411 = vld [vmem:[#allocation6 + $0x3d0] sm:$0xff]
    %v412 = vld [vmem:[#allocation6 + $0x3d8] sm:$0xff]
    %v413 = vld [vmem:[#allocation6 + $0x3e0] sm:$0xff]
    %v414 = vld [vmem:[#allocation6 + $0x3e8] sm:$0xff]
    %v415 = vld [vmem:[#allocation6 + $0x3f0] sm:$0xff]
    %v416 = vld [vmem:[#allocation6 + $0x3f8] sm:$0xff]
    %v417 = vld [vmem:[%s4] sm:$0x3]
    %v419 = vlaneseq
    %v420 = vshrl.u32 %v419, 7
    %v421 = vsub.s32 0, %v420
    %v422 = vrot.slane %v417, %v421
    %v423 = vlaneseq
    %v424 = vshrl.u32 %v423, 7
    %v425 = vsub.s32 1, %v424
    %v426 = vrot.slane %v417, %v425
    %429 = vmatprep.subr.mxu0 %v320
    %430 = vmatpush1.msra.mxu0 %v319
    %431 = vmatprep.subr.mxu0 %v318
    %432 = vmatpush1.msra.mxu0 %v317
    %433 = vmatprep.subr.mxu0 %v316
    %434 = vmatpush1.msra.mxu0 %v315
    %435 = vmatprep.subr.mxu0 %v314
    %436 = vmatpush1.msra.mxu0 %v313
    %437 = vmatprep.subr.mxu0 %v312
    %438 = vmatpush1.msra.mxu0 %v311
    %439 = vmatprep.subr.mxu0 %v310
    %440 = vmatpush1.msra.mxu0 %v309
    %441 = vmatprep.subr.mxu0 %v308
    %442 = vmatpush1.msra.mxu0 %v307
    %443 = vmatprep.subr.mxu0 %v306
    %444 = vmatpush1.msra.mxu0 %v305
    %445 = vmatprep.subr.mxu0 %v304
    %446 = vmatpush1.msra.mxu0 %v303
    %447 = vmatprep.subr.mxu0 %v302
    %448 = vmatpush1.msra.mxu0 %v301
    %449 = vmatprep.subr.mxu0 %v300
    %450 = vmatpush1.msra.mxu0 %v299
    %451 = vmatprep.subr.mxu0 %v298
    %452 = vmatpush1.msra.mxu0 %v297
    %453 = vmatprep.subr.mxu0 %v296
    %454 = vmatpush1.msra.mxu0 %v295
    %455 = vmatprep.subr.mxu0 %v294
    %456 = vmatpush1.msra.mxu0 %v293
    %457 = vmatprep.subr.mxu0 %v292
    %458 = vmatpush1.msra.mxu0 %v291
    %459 = vmatprep.subr.mxu0 %v290
    %460 = vmatpush1.msra.mxu0 %v289
    %461 = vmatprep.subr.mxu0 %v352
    %462 = vmatpush2.msra.mxu0 %v351
    %463 = vmatprep.subr.mxu0 %v350
    %464 = vmatpush2.msra.mxu0 %v349
    %465 = vmatprep.subr.mxu0 %v348
    %466 = vmatpush2.msra.mxu0 %v347
    %467 = vmatprep.subr.mxu0 %v346
    %468 = vmatpush2.msra.mxu0 %v345
    %469 = vmatprep.subr.mxu0 %v344
    %470 = vmatpush2.msra.mxu0 %v343
    %471 = vmatprep.subr.mxu0 %v342
    %472 = vmatpush2.msra.mxu0 %v341
    %473 = vmatprep.subr.mxu0 %v340
    %474 = vmatpush2.msra.mxu0 %v339
    %475 = vmatprep.subr.mxu0 %v338
    %476 = vmatpush2.msra.mxu0 %v337
    %477 = vmatprep.subr.mxu0 %v336
    %478 = vmatpush2.msra.mxu0 %v335
    %479 = vmatprep.subr.mxu0 %v334
    %480 = vmatpush2.msra.mxu0 %v333
    %481 = vmatprep.subr.mxu0 %v332
    %482 = vmatpush2.msra.mxu0 %v331
    %483 = vmatprep.subr.mxu0 %v330
    %484 = vmatpush2.msra.mxu0 %v329
    %485 = vmatprep.subr.mxu0 %v328
    %486 = vmatpush2.msra.mxu0 %v327
    %487 = vmatprep.subr.mxu0 %v326
    %488 = vmatpush2.msra.mxu0 %v325
    %489 = vmatprep.subr.mxu0 %v324
    %490 = vmatpush2.msra.mxu0 %v323
    %491 = vmatprep.subr.mxu0 %v322
    %492 = vmatpush2.msra.mxu0 %v321
    %493 = vmatprep.mubr.f32.mxu0 %v286
    %494 = vmatmul.mubr.f32.gmra.mxu0 %v285
    %v495 = vpop.f32.mrf.mxu0
    %v496 = vadd.f32 %v422, %v495
    %v497 = vpop.f32.mrf.mxu0
    %v498 = vadd.f32 %v426, %v497
    %499 = vdwg.mxu0
    %500 = vmatprep.subr.mxu0 %v384
    %501 = vmatpush1.msra.mxu0 %v383
    %502 = vmatprep.subr.mxu0 %v382
    %503 = vmatpush1.msra.mxu0 %v381
    %504 = vmatprep.subr.mxu0 %v380
    %505 = vmatpush1.msra.mxu0 %v379
    %506 = vmatprep.subr.mxu0 %v378
    %507 = vmatpush1.msra.mxu0 %v377
    %508 = vmatprep.subr.mxu0 %v376
    %509 = vmatpush1.msra.mxu0 %v375
    %510 = vmatprep.subr.mxu0 %v374
    %511 = vmatpush1.msra.mxu0 %v373
    %512 = vmatprep.subr.mxu0 %v372
    %513 = vmatpush1.msra.mxu0 %v371
    %514 = vmatprep.subr.mxu0 %v370
    %515 = vmatpush1.msra.mxu0 %v369
    %516 = vmatprep.subr.mxu0 %v368
    %517 = vmatpush1.msra.mxu0 %v367
    %518 = vmatprep.subr.mxu0 %v366
    %519 = vmatpush1.msra.mxu0 %v365
    %520 = vmatprep.subr.mxu0 %v364
    %521 = vmatpush1.msra.mxu0 %v363
    %522 = vmatprep.subr.mxu0 %v362
    %523 = vmatpush1.msra.mxu0 %v361
    %524 = vmatprep.subr.mxu0 %v360
    %525 = vmatpush1.msra.mxu0 %v359
    %526 = vmatprep.subr.mxu0 %v358
    %527 = vmatpush1.msra.mxu0 %v357
    %528 = vmatprep.subr.mxu0 %v356
    %529 = vmatpush1.msra.mxu0 %v355
    %530 = vmatprep.subr.mxu0 %v354
    %531 = vmatpush1.msra.mxu0 %v353
    %532 = vmatprep.subr.mxu0 %v416
    %533 = vmatpush2.msra.mxu0 %v415
    %534 = vmatprep.subr.mxu0 %v414
    %535 = vmatpush2.msra.mxu0 %v413
    %536 = vmatprep.subr.mxu0 %v412
    %537 = vmatpush2.msra.mxu0 %v411
    %538 = vmatprep.subr.mxu0 %v410
    %539 = vmatpush2.msra.mxu0 %v409
    %540 = vmatprep.subr.mxu0 %v408
    %541 = vmatpush2.msra.mxu0 %v407
    %542 = vmatprep.subr.mxu0 %v406
    %543 = vmatpush2.msra.mxu0 %v405
    %544 = vmatprep.subr.mxu0 %v404
    %545 = vmatpush2.msra.mxu0 %v403
    %546 = vmatprep.subr.mxu0 %v402
    %547 = vmatpush2.msra.mxu0 %v401
    %548 = vmatprep.subr.mxu0 %v400
    %549 = vmatpush2.msra.mxu0 %v399
    %550 = vmatprep.subr.mxu0 %v398
    %551 = vmatpush2.msra.mxu0 %v397
    %552 = vmatprep.subr.mxu0 %v396
    %553 = vmatpush2.msra.mxu0 %v395
    %554 = vmatprep.subr.mxu0 %v394
    %555 = vmatpush2.msra.mxu0 %v393
    %556 = vmatprep.subr.mxu0 %v392
    %557 = vmatpush2.msra.mxu0 %v391
    %558 = vmatprep.subr.mxu0 %v390
    %559 = vmatpush2.msra.mxu0 %v389
    %560 = vmatprep.subr.mxu0 %v388
    %561 = vmatpush2.msra.mxu0 %v387
    %562 = vmatprep.subr.mxu0 %v386
    %563 = vmatpush2.msra.mxu0 %v385
    %564 = vmatprep.mubr.f32.mxu0 %v288
    %565 = vmatmul.mubr.f32.gmra.mxu0 %v287
    %v566 = vpop.f32.mrf.mxu0
    %v567 = vadd.f32 %v496, %v566
    %v568 = vpop.f32.mrf.mxu0
    %v569 = vadd.f32 %v498, %v568
    %570 = vdwg.mxu0
    %v571 = vmax.f32 %v567, 0.0
    %v572 = vmax.f32 %v569, 0.0
    %v573 = vld [vmem:[%s5] sm:$0xff]
    %v574 = vld [vmem:[%s5 + $0x8] sm:$0xff]
    %v575 = vld [vmem:[%s5 + $0x10] sm:$0xff]
    %v576 = vld [vmem:[%s5 + $0x18] sm:$0xff]
    %v577 = vld [vmem:[%s5 + $0x20] sm:$0xff]
    %v578 = vld [vmem:[%s5 + $0x28] sm:$0xff]
    %v579 = vld [vmem:[%s5 + $0x30] sm:$0xff]
    %v580 = vld [vmem:[%s5 + $0x38] sm:$0xff]
    %v581 = vld [vmem:[%s5 + $0x40] sm:$0xff]
    %v582 = vld [vmem:[%s5 + $0x48] sm:$0xff]
    %v583 = vld [vmem:[%s5 + $0x50] sm:$0xff]
    %v584 = vld [vmem:[%s5 + $0x58] sm:$0xff]
    %v585 = vld [vmem:[%s5 + $0x60] sm:$0xff]
    %v586 = vld [vmem:[%s5 + $0x68] sm:$0xff]
    %v587 = vld [vmem:[%s5 + $0x70] sm:$0xff]
    %v588 = vld [vmem:[%s5 + $0x78] sm:$0xff]
    %v589 = vld [vmem:[%s5 + $0x80] sm:$0xff]
    %v590 = vld [vmem:[%s5 + $0x88] sm:$0xff]
    %v591 = vld [vmem:[%s5 + $0x90] sm:$0xff]
    %v592 = vld [vmem:[%s5 + $0x98] sm:$0xff]
    %v593 = vld [vmem:[%s5 + $0xa0] sm:$0xff]
    %v594 = vld [vmem:[%s5 + $0xa8] sm:$0xff]
    %v595 = vld [vmem:[%s5 + $0xb0] sm:$0xff]
    %v596 = vld [vmem:[%s5 + $0xb8] sm:$0xff]
    %v597 = vld [vmem:[%s5 + $0xc0] sm:$0xff]
    %v598 = vld [vmem:[%s5 + $0xc8] sm:$0xff]
    %v599 = vld [vmem:[%s5 + $0xd0] sm:$0xff]
    %v600 = vld [vmem:[%s5 + $0xd8] sm:$0xff]
    %v601 = vld [vmem:[%s5 + $0xe0] sm:$0xff]
    %v602 = vld [vmem:[%s5 + $0xe8] sm:$0xff]
    %v603 = vld [vmem:[%s5 + $0xf0] sm:$0xff]
    %v604 = vld [vmem:[%s5 + $0xf8] sm:$0xff]
    %s605 = sld [smem:[#allocation2]]
    %v606 = vstv %s605
    %607 = vmatprep.subr.mxu0 0.0
    %608 = vmatpush1.msra.mxu0 %v588
    %609 = vmatprep.subr.mxu0 0.0
    %610 = vmatpush1.msra.mxu0 %v587
    %611 = vmatprep.subr.mxu0 0.0
    %612 = vmatpush1.msra.mxu0 %v586
    %613 = vmatprep.subr.mxu0 0.0
    %614 = vmatpush1.msra.mxu0 %v585
    %615 = vmatprep.subr.mxu0 0.0
    %616 = vmatpush1.msra.mxu0 %v584
    %617 = vmatprep.subr.mxu0 0.0
    %618 = vmatpush1.msra.mxu0 %v583
    %619 = vmatprep.subr.mxu0 0.0
    %620 = vmatpush1.msra.mxu0 %v582
    %621 = vmatprep.subr.mxu0 0.0
    %622 = vmatpush1.msra.mxu0 %v581
    %623 = vmatprep.subr.mxu0 0.0
    %624 = vmatpush1.msra.mxu0 %v580
    %625 = vmatprep.subr.mxu0 0.0
    %626 = vmatpush1.msra.mxu0 %v579
    %627 = vmatprep.subr.mxu0 0.0
    %628 = vmatpush1.msra.mxu0 %v578
    %629 = vmatprep.subr.mxu0 0.0
    %630 = vmatpush1.msra.mxu0 %v577
    %631 = vmatprep.subr.mxu0 0.0
    %632 = vmatpush1.msra.mxu0 %v576
    %633 = vmatprep.subr.mxu0 0.0
    %634 = vmatpush1.msra.mxu0 %v575
    %635 = vmatprep.subr.mxu0 0.0
    %636 = vmatpush1.msra.mxu0 %v574
    %637 = vmatprep.subr.mxu0 0.0
    %638 = vmatpush1.msra.mxu0 %v573
    %639 = vmatprep.subr.mxu0 0.0
    %640 = vmatpush2.msra.mxu0 %v604
    %641 = vmatprep.subr.mxu0 0.0
    %642 = vmatpush2.msra.mxu0 %v603
    %643 = vmatprep.subr.mxu0 0.0
    %644 = vmatpush2.msra.mxu0 %v602
    %645 = vmatprep.subr.mxu0 0.0
    %646 = vmatpush2.msra.mxu0 %v601
    %647 = vmatprep.subr.mxu0 0.0
    %648 = vmatpush2.msra.mxu0 %v600
    %649 = vmatprep.subr.mxu0 0.0
    %650 = vmatpush2.msra.mxu0 %v599
    %651 = vmatprep.subr.mxu0 0.0
    %652 = vmatpush2.msra.mxu0 %v598
    %653 = vmatprep.subr.mxu0 0.0
    %654 = vmatpush2.msra.mxu0 %v597
    %655 = vmatprep.subr.mxu0 0.0
    %656 = vmatpush2.msra.mxu0 %v596
    %657 = vmatprep.subr.mxu0 0.0
    %658 = vmatpush2.msra.mxu0 %v595
    %659 = vmatprep.subr.mxu0 0.0
    %660 = vmatpush2.msra.mxu0 %v594
    %661 = vmatprep.subr.mxu0 0.0
    %662 = vmatpush2.msra.mxu0 %v593
    %663 = vmatprep.subr.mxu0 0.0
    %664 = vmatpush2.msra.mxu0 %v592
    %665 = vmatprep.subr.mxu0 0.0
    %666 = vmatpush2.msra.mxu0 %v591
    %667 = vmatprep.subr.mxu0 0.0
    %668 = vmatpush2.msra.mxu0 %v590
    %669 = vmatprep.subr.mxu0 0.0
    %670 = vmatpush2.msra.mxu0 %v589
    %671 = vmatprep.mubr.f32.mxu0 %v572
    %672 = vmatmul.mubr.f32.gmra.mxu0 %v571
    %v673 = vpop.f32.mrf.mxu0
    %v674 = vadd.f32 %v606, %v673
    %v675 = vpop.f32.mrf.mxu0
    %676 = vdwg.mxu0
    %vm677 = vcmask 64512
    %678 = vst.msk [vmem:[#allocation8] sm:$0xff] %vm677, %v674
    // Predicated region
    $region38: #{tpu_custom_call.1} parent=1 // pred_check
      _
    $region39: #{tpu_custom_call.1} parent=1 // pred_check_branch
      %680 = sbr.rel (0) target = $region41
    $region40: #{tpu_custom_call.1} parent=1 // pred_region
      %s682 = ssub.s32 128, 128
      %683 = vsyncadd [#allocation5], %s682
      %s685 = sshll.u32 [#allocation8], 4
      %s686 = int_to_ptr.vmem [resolvable:$true] %s685
      %688 = dma.vmem_to_hbm [thread:$0]  %s686, 128, %s7, [#allocation5]
    $region41: #{tpu_custom_call.1} parent=1 // pred_fallthru
      _
    // Predicated region
    $region42: #{tpu_custom_call.1} parent=1 // pred_check
      _
    $region43: #{tpu_custom_call.1} parent=1 // pred_check_branch
      %690 = sbr.rel (0) target = $region45
    $region44: #{tpu_custom_call.1} parent=1 // pred_region
      %691 = dma.done [#allocation5], 128
    $region45: #{tpu_custom_call.1} parent=1 // pred_fallthru
      _
    %692 = vsyncpa [#allocation4], 1
    %693 = vsyncpa [#allocation7], 1
    %694 = vsyncpa [#allocation5], 1

</llo_original>
